<compile_context>
chip_gen: v7x
topology: tpu7x:2x2x1
jax: 0.10.0
libtpu: 0.0.40
codegen_flags: <defaults>
</compile_context>

<pallas_src>
import functools
import math

import jax
import jax.numpy as jnp
from jax.experimental import pallas as pl
from jax.experimental.pallas import tpu as pltpu


def _round_up(x, m):
    return ((x + m - 1) // m) * m


def _default_exp_dtype():
    # bf16 exp only where the EUP supports it (v6e / v7x); f32 elsewhere (v5e has no bf16 EUP).
    try:
        kind = jax.devices()[0].device_kind.lower()
    except Exception:
        kind = ""
    if ("v6" in kind) or ("v7" in kind):
        return jnp.bfloat16
    return jnp.float32


def linear_kernel(x_ref, w_ref, asrc_ref, adst_ref, h_ref, alphas_ref, alphad_ref):
    # h = x @ W^T  (bf16 inputs, f32 accumulation on the MXU)
    h = jnp.dot(x_ref[...], w_ref[...], preferred_element_type=jnp.float32)   # (TM, Fp)
    # alpha_src_i = <h_i, a_src>, alpha_dst_i = <h_i, a_dst> — VPU mul + lane reduce, (TM, 1)
    alphas_ref[...] = jnp.sum(h * asrc_ref[...], axis=-1, keepdims=True)
    alphad_ref[...] = jnp.sum(h * adst_ref[...], axis=-1, keepdims=True)
    h_ref[...] = h.astype(h_ref.dtype)


def attn_kernel(cnt_ref, ids_ref, hs_ref, asrc_ref, ad_ref, bias_ref, adj_ref, out_ref,
                m_sc, l_sc, acc_sc, *, exp_dtype):
    i = pl.program_id(0)
    k = pl.program_id(1)

    @pl.when(k == 0)
    def _():
        m_sc[...] = jnp.full_like(m_sc, -1e30)
        l_sc[...] = jnp.zeros_like(l_sc)
        acc_sc[...] = jnp.zeros_like(acc_sc)

    # Block-sparse: only the first cnt_ref[i] grid steps carry a real (nonzero) src tile.
    @pl.when(k < cnt_ref[i])
    def _():
        e = ad_ref[...] + asrc_ref[...]                               # (TM,1)+(1,TK) -> (TM,TK)
        e = jnp.maximum(e, 0.2 * e)                                   # LeakyReLU(0.2), single vmax
        e = jnp.where(adj_ref[...] > 0, e, jnp.float32(-1e30))        # mask non-edges

        # Online (flash-style) softmax update over the src axis.
        m_prev = m_sc[...]
        m_new = jnp.maximum(m_prev, jnp.max(e, axis=-1, keepdims=True))
        scale = jnp.exp(m_prev - m_new)                               # (TM,1), f32
        p = jnp.exp((e - m_new).astype(exp_dtype))                    # bf16 exp on v6e/v7x
        # Rows that have not yet seen a real edge accumulate p=1 garbage; the first real edge
        # (self loops on every row, incl. padded rows, guarantee one) makes
        # scale = exp(-1e30 - m_new) == 0 and annihilates it. Do not remove the diag fill.
        l_sc[...] = scale * l_sc[...] + jnp.sum(
            p.astype(jnp.float32), axis=-1, keepdims=True)
        acc_sc[...] = scale * acc_sc[...] + jnp.dot(
            p.astype(jnp.bfloat16), hs_ref[...], preferred_element_type=jnp.float32)
        m_sc[...] = m_new

    @pl.when(k == pl.num_programs(1) - 1)
    def _():
        # Fold 1/denominator into the (TM, Fp) result instead of dividing the (TM, TK) probs.
        inv = pl.reciprocal(l_sc[...], approx=True)
        out_ref[...] = (acc_sc[...] * inv + bias_ref[...]).astype(out_ref.dtype)
    # TODO(synk): training-time F.dropout on attention weights not applied (eval-mode forward).


def rgat_forward(x, edge_index, w_t, a_src, a_dst, bias, *, tm=256, tk=512):
    """x: (N, F_in) f32; edge_index: (2, E) int32 (row 0 = src, row 1 = dst)."""
    n, f_in = x.shape
    f_out = w_t.shape[1]

    n_pad = _round_up(n, math.lcm(tm, tk))
    f_pad = _round_up(f_out, 128)          # lane-dense output / h
    f_in_pad = _round_up(f_in, 128)        # lane-dense x loads, fully occupied MXU contraction

    exp_dtype = _default_exp_dtype()

    # Zero-pad nodes and feature dims (padding is sliced off at the end).
    xp = jnp.zeros((n_pad, f_in_pad), jnp.bfloat16).at[:n, :f_in].set(x.astype(jnp.bfloat16))
    wp = jnp.zeros((f_in_pad, f_pad), jnp.bfloat16).at[:f_in, :f_out].set(w_t.astype(jnp.bfloat16))
    asp = jnp.zeros((1, f_pad), jnp.float32).at[:, :f_out].set(a_src.astype(jnp.float32))
    adp = jnp.zeros((1, f_pad), jnp.float32).at[:, :f_out].set(a_dst.astype(jnp.float32))
    bp = jnp.zeros((1, f_pad), jnp.float32).at[:, :f_out].set(bias.astype(jnp.float32))

    # Glue: dense int8 adjacency mask adj[dst, src] = 1, plus self loops (add_self_loops=True).
    # Note: duplicate edges collapse to one entry (binary mask), matching the f32 reference.
    src, dst = edge_index[0], edge_index[1]
    adj = jnp.zeros((n_pad, n_pad), jnp.int8)
    adj = adj.at[dst, src].set(1)
    diag = jnp.arange(n_pad)
    adj = adj.at[diag, diag].set(1)
    # TODO(synk): avoid materializing the dense O(N^2) adjacency in HBM; build only per-tile
    # bitmaps/CSR for the nonzero tiles (the kernel below already reads only nonzero tiles).

    # Per-dst-tile compacted list of nonzero src tiles (scalar-prefetch metadata).
    n_dst_tiles = n_pad // tm
    n_src_tiles = n_pad // tk
    tile_mask = jnp.zeros((n_dst_tiles, n_src_tiles), jnp.bool_)
    tile_mask = tile_mask.at[dst // tm, src // tk].set(True)
    tile_mask = tile_mask.at[diag // tm, diag // tk].set(True)      # self loops -> cnt >= 1
    tile_cnt = jnp.sum(tile_mask, axis=1).astype(jnp.int32)          # (n_dst_tiles,)
    order = jnp.argsort((~tile_mask).astype(jnp.int32), axis=1, stable=True).astype(jnp.int32)
    max_cnt = int(jnp.max(tile_cnt))                                 # static src-grid extent
    pos = jnp.arange(max_cnt, dtype=jnp.int32)[None, :]
    clamped = jnp.minimum(pos, tile_cnt[:, None] - 1)                # repeat last real tile id
    tile_ids = jnp.take_along_axis(order[:, :max_cnt], clamped, axis=1).astype(jnp.int32)

    cparams1 = pltpu.CompilerParams(
        dimension_semantics=("parallel",),
        vmem_limit_bytes=32 * 1024 * 1024)

    # Pass 1: h = x @ W^T (bf16) and alpha_src / alpha_dst = <h, a_*>, tiled over node rows.
    h, alpha_src_col, alpha_dst = pl.pallas_call(
        linear_kernel,
        out_shape=(jax.ShapeDtypeStruct((n_pad, f_pad), jnp.bfloat16),
                   jax.ShapeDtypeStruct((n_pad, 1), jnp.float32),
                   jax.ShapeDtypeStruct((n_pad, 1), jnp.float32)),
        grid_spec=pltpu.PrefetchScalarGridSpec(
            num_scalar_prefetch=0,
            grid=(n_pad // tm,),
            in_specs=[pl.BlockSpec((tm, f_in_pad), lambda i: (i, 0)),
                      pl.BlockSpec((f_in_pad, f_pad), lambda i: (0, 0)),  # W resident
                      pl.BlockSpec((1, f_pad), lambda i: (0, 0)),         # a_src resident
                      pl.BlockSpec((1, f_pad), lambda i: (0, 0))],        # a_dst resident
            out_specs=[pl.BlockSpec((tm, f_pad), lambda i: (i, 0)),
                       pl.BlockSpec((tm, 1), lambda i: (i, 0)),
                       pl.BlockSpec((tm, 1), lambda i: (i, 0))]),
        compiler_params=cparams1,
    )(xp, wp, asp, adp)

    # alpha_src as a (1, n_pad) row so pass 2 can stream lane-aligned (1, tk) blocks.
    alpha_src_row = alpha_src_col.reshape(1, n_pad)

    # Pass 2: block-sparse, tiled online-softmax attention + aggregation.
    out = pl.pallas_call(
        functools.partial(attn_kernel, exp_dtype=exp_dtype),
        out_shape=jax.ShapeDtypeStruct((n_pad, f_pad), jnp.float32),
        grid_spec=pltpu.PrefetchScalarGridSpec(
            num_scalar_prefetch=2,                                   # tile_cnt, tile_ids
            grid=(n_dst_tiles, max_cnt),
            in_specs=[
                pl.BlockSpec((tk, f_pad), lambda i, k, cnt, ids: (ids[i, k], 0)),  # h (src rows)
                pl.BlockSpec((1, tk), lambda i, k, cnt, ids: (0, ids[i, k])),      # alpha_src row
                pl.BlockSpec((tm, 1), lambda i, k, cnt, ids: (i, 0)),              # alpha_dst col
                pl.BlockSpec((1, f_pad), lambda i, k, cnt, ids: (0, 0)),           # bias resident
                pl.BlockSpec((tm, tk), lambda i, k, cnt, ids: (i, ids[i, k]))],    # int8 adj tile
            out_specs=pl.BlockSpec((tm, f_pad), lambda i, k, cnt, ids: (i, 0)),
            scratch_shapes=[pltpu.VMEM((tm, 1), jnp.float32),        # running max
                            pltpu.VMEM((tm, 1), jnp.float32),        # running denom
                            pltpu.VMEM((tm, f_pad), jnp.float32)]),  # running accumulator
        compiler_params=pltpu.CompilerParams(
            dimension_semantics=("parallel", "arbitrary"),
            vmem_limit_bytes=32 * 1024 * 1024),
    )(tile_cnt, tile_ids, h, alpha_src_row, alpha_dst, bp, adj)

    return out[:n, :f_out]


def rgat_reference(x, edge_index, w_t, a_src, a_dst, bias):
    n = x.shape[0]
    src, dst = edge_index[0], edge_index[1]
    adj = jnp.zeros((n, n), jnp.float32)
    adj = adj.at[dst, src].set(1.0)
    diag = jnp.arange(n)
    adj = adj.at[diag, diag].set(1.0)

    h = x @ w_t
    asrc = h @ a_src.reshape(-1)
    adst = h @ a_dst.reshape(-1)
    e = adst[:, None] + asrc[None, :]
    e = jnp.where(e > 0, e, 0.2 * e)
    e = jnp.where(adj > 0, e, -jnp.inf)
    attn = jax.nn.softmax(e, axis=-1)
    return attn @ h + bias


if __name__ == "__main__":
    # Small, but large enough to exercise padding, multiple dst tiles and (in the second
    # config) multiple src tiles through the block-sparse scalar-prefetch path.
    N, F_IN, F_OUT, E = 200, 64, 64, 800

    key = jax.random.PRNGKey(0)
    kx, ke, kw, ks, kd = jax.random.split(key, 5)

    x = jax.random.normal(kx, (N, F_IN), dtype=jnp.float32)
    edge_index = jax.random.randint(ke, (2, E), 0, N, dtype=jnp.int32)

    # Deterministic parameter init (glorot-style scale), shapes per GATConv(F_IN, F_OUT):
    #   lin weight (F_OUT, F_IN) -> stored transposed as (F_IN, F_OUT)
    #   att_src / att_dst (1, heads=1, F_OUT) -> (1, F_OUT); bias (F_OUT,) -> (1, F_OUT)
    w_scale = (2.0 / (F_IN + F_OUT)) ** 0.5
    a_scale = (2.0 / (F_OUT + 1)) ** 0.5
    w_t = w_scale * jax.random.normal(kw, (F_IN, F_OUT), dtype=jnp.float32)
    a_src = a_scale * jax.random.normal(ks, (1, F_OUT), dtype=jnp.float32)
    a_dst = a_scale * jax.random.normal(kd, (1, F_OUT), dtype=jnp.float32)
    bias = jnp.zeros((1, F_OUT), dtype=jnp.float32)

    ref = rgat_reference(x, edge_index, w_t, a_src, a_dst, bias)

    # Default (large-tile) config: tm=256, tk=512 -> 2 dst tiles (keeps both v7x cores busy).
    out = rgat_forward(x, edge_index, w_t, a_src, a_dst, bias)
    out = jax.block_until_ready(out)
    assert out.shape == (N, F_OUT)
    max_err = float(jnp.max(jnp.abs(out - ref)))
    # Tolerance is loose relative to f32: bf16 MXU inputs, bf16 h storage, bf16 exp on
    # v6e/v7x, and an approx EUP reciprocal for 1/denom (all f32-accumulated).
    assert jnp.allclose(out, ref, rtol=5e-2, atol=5e-2), f"mismatch (big tiles), max|err|={max_err}"

    # Small-tile config exercises the multi-src-tile compaction / data-dependent index maps.
    out2 = rgat_forward(x, edge_index, w_t, a_src, a_dst, bias, tm=128, tk=128)
    out2 = jax.block_until_ready(out2)
    max_err2 = float(jnp.max(jnp.abs(out2 - ref)))
    assert jnp.allclose(out2, ref, rtol=5e-2, atol=5e-2), f"mismatch (small tiles), max|err|={max_err2}"

    print("KERNEL_OK")
</pallas_src>

<mosaic_0001>
module attributes {stable_mosaic.version = 11 : i64} {
  func.func @linear_kernel(%arg0: i32, %arg1: memref<256x128xbf16, #tpu.memory_space<vmem>>, %arg2: memref<128x128xbf16, #tpu.memory_space<vmem>>, %arg3: memref<1x128xf32, #tpu.memory_space<vmem>>, %arg4: memref<1x128xf32, #tpu.memory_space<vmem>>, %arg5: memref<256x128xbf16, #tpu.memory_space<vmem>>, %arg6: memref<256x1xf32, #tpu.memory_space<vmem>>, %arg7: memref<256x1xf32, #tpu.memory_space<vmem>>) attributes {dimension_semantics = [#tpu.dimension_semantics<parallel>], iteration_bounds = array<i64: 2>, scalar_prefetch = 0 : i64, scratch_operands = 0 : i64, tpu.core_type = #tpu.core_type<tc>, window_params = [{transform_indices = @transform_0, window_bounds = array<i64: 256, 128>}, {pipeline_mode = #tpu.pipeline_mode<synchronous>, transform_indices = @transform_1, window_bounds = array<i64: 128, 128>}, {pipeline_mode = #tpu.pipeline_mode<synchronous>, transform_indices = @transform_2, window_bounds = array<i64: 1, 128>}, {pipeline_mode = #tpu.pipeline_mode<synchronous>, transform_indices = @transform_3, window_bounds = array<i64: 1, 128>}, {transform_indices = @transform_4, window_bounds = array<i64: 256, 128>}, {transform_indices = @transform_5, window_bounds = array<i64: 256, 1>}, {transform_indices = @transform_6, window_bounds = array<i64: 256, 1>}]} {
    %c0 = arith.constant 0 : index
    %c0_0 = arith.constant 0 : index
    %0 = vector.load %arg1[%c0, %c0_0] : memref<256x128xbf16, #tpu.memory_space<vmem>>, vector<256x128xbf16>
    %c0_1 = arith.constant 0 : index
    %c0_2 = arith.constant 0 : index
    %1 = vector.load %arg2[%c0_1, %c0_2] : memref<128x128xbf16, #tpu.memory_space<vmem>>, vector<128x128xbf16>
    %cst = arith.constant dense<0.000000e+00> : vector<256x128xf32>
    %2 = tpu.matmul %0, %1, %cst {dimension_numbers = #tpu.dot_dimension_numbers<[1], [0], [0], [1], [0, 0, 1, 1], [], []>} : vector<256x128xbf16>, vector<128x128xbf16>, vector<256x128xf32> -> vector<256x128xf32>
    %c0_3 = arith.constant 0 : index
    %c0_4 = arith.constant 0 : index
    %3 = vector.load %arg3[%c0_3, %c0_4] : memref<1x128xf32, #tpu.memory_space<vmem>>, vector<1x128xf32>
    %4 = vector.broadcast %3 : vector<1x128xf32> to vector<256x128xf32>
    %5 = arith.mulf %2, %4 : vector<256x128xf32>
    %cst_5 = arith.constant dense<0.000000e+00> : vector<256xf32>
    %6 = vector.multi_reduction <add>, %5, %cst_5 [1] : vector<256x128xf32> to vector<256xf32>
    %7 = vector.shape_cast %6 : vector<256xf32> to vector<256x1xf32>
    %c0_6 = arith.constant 0 : index
    %c0_7 = arith.constant 0 : index
    %8 = vector.load %arg6[%c0_6, %c0_7] : memref<256x1xf32, #tpu.memory_space<vmem>>, vector<256x1xf32>
    tpu.vector_store %arg6[%c0_6, %c0_7], %7 {strides = array<i32>} : memref<256x1xf32, #tpu.memory_space<vmem>>, vector<256x1xf32>,
    %c0_8 = arith.constant 0 : index
    %c0_9 = arith.constant 0 : index
    %9 = vector.load %arg4[%c0_8, %c0_9] : memref<1x128xf32, #tpu.memory_space<vmem>>, vector<1x128xf32>
    %10 = vector.broadcast %9 : vector<1x128xf32> to vector<256x128xf32>
    %11 = arith.mulf %2, %10 : vector<256x128xf32>
    %cst_10 = arith.constant dense<0.000000e+00> : vector<256xf32>
    %12 = vector.multi_reduction <add>, %11, %cst_10 [1] : vector<256x128xf32> to vector<256xf32>
    %13 = vector.shape_cast %12 : vector<256xf32> to vector<256x1xf32>
    %c0_11 = arith.constant 0 : index
    %c0_12 = arith.constant 0 : index
    %14 = vector.load %arg7[%c0_11, %c0_12] : memref<256x1xf32, #tpu.memory_space<vmem>>, vector<256x1xf32>
    tpu.vector_store %arg7[%c0_11, %c0_12], %13 {strides = array<i32>} : memref<256x1xf32, #tpu.memory_space<vmem>>, vector<256x1xf32>,
    %15 = arith.truncf %2 : vector<256x128xf32> to vector<256x128xbf16>
    %c0_13 = arith.constant 0 : index
    %c0_14 = arith.constant 0 : index
    %16 = vector.load %arg5[%c0_13, %c0_14] : memref<256x128xbf16, #tpu.memory_space<vmem>>, vector<256x128xbf16>
    tpu.vector_store %arg5[%c0_13, %c0_14], %15 {strides = array<i32>} : memref<256x128xbf16, #tpu.memory_space<vmem>>, vector<256x128xbf16>,
    return
  }
  func.func @transform_0(%arg0: i32) -> (i32, i32) {
    %c0_i32 = arith.constant 0 : i32
    %c0_i32_0 = arith.constant 0 : i32
    return %arg0, %c0_i32 : i32, i32
  }
  func.func @transform_1(%arg0: i32) -> (i32, i32) {
    %c0_i32 = arith.constant 0 : i32
    %c0_i32_0 = arith.constant 0 : i32
    %c0_i32_1 = arith.constant 0 : i32
    return %c0_i32, %c0_i32_0 : i32, i32
  }
  func.func @transform_2(%arg0: i32) -> (i32, i32) {
    %c0_i32 = arith.constant 0 : i32
    %c0_i32_0 = arith.constant 0 : i32
    %c0_i32_1 = arith.constant 0 : i32
    return %c0_i32, %c0_i32_0 : i32, i32
  }
  func.func @transform_3(%arg0: i32) -> (i32, i32) {
    %c0_i32 = arith.constant 0 : i32
    %c0_i32_0 = arith.constant 0 : i32
    %c0_i32_1 = arith.constant 0 : i32
    return %c0_i32, %c0_i32_0 : i32, i32
  }
  func.func @transform_4(%arg0: i32) -> (i32, i32) {
    %c0_i32 = arith.constant 0 : i32
    %c0_i32_0 = arith.constant 0 : i32
    return %arg0, %c0_i32 : i32, i32
  }
  func.func @transform_5(%arg0: i32) -> (i32, i32) {
    %c0_i32 = arith.constant 0 : i32
    %c0_i32_0 = arith.constant 0 : i32
    return %arg0, %c0_i32 : i32, i32
  }
  func.func @transform_6(%arg0: i32) -> (i32, i32) {
    %c0_i32 = arith.constant 0 : i32
    %c0_i32_0 = arith.constant 0 : i32
    return %arg0, %c0_i32 : i32, i32
  }
}

</mosaic_0001>

<llo_original>
// kernel: tpu_custom_call.1
$region0: #{tpu_custom_call.1}
  #allocation0 [shape = 'u32[]', space=smem, size = 0x4, offset = 0x4, fixed_abs, tag = 'smem constant byte address 0x4 - core index']
  #allocation1 [shape = 'u32[144,128]{1,0:T(1,128)}', space=vmem, size = 0x12000, scoped, tag = 'internal scratch']
  %s0 = inlined_call_operand.hbm [shape: bf16[512,128], index: 0, kind: input, shape index: {}]
  %s1 = inlined_call_operand.hbm [shape: bf16[128,128], index: 1, kind: input, shape index: {}]
  %s2 = inlined_call_operand.vmem [shape: f32[1,128], index: 2, kind: input, shape index: {}]
  %s3 = inlined_call_operand.vmem [shape: f32[1,128], index: 3, kind: input, shape index: {}]
  %s4 = inlined_call_operand.hbm [shape: bf16[512,128], index: 4, kind: output, shape index: {0}]
  %s5 = inlined_call_operand.vmem [shape: f32[512,1], index: 5, kind: output, shape index: {1}]
  %s6 = inlined_call_operand.vmem [shape: f32[512,1], index: 6, kind: output, shape index: {2}]
  %7 = xla_tuple %s4, %s5, %s6
  %s8 = sld [smem:[#allocation0]]
  $region73: #{tpu_custom_call.1} parent=0
    _
  %s10 = ssub.s32 1, %s8
  %s11 = scalar_select 0, %s10, %s8
  $region1: #{tpu_custom_call.1} parent=0
    #allocation2 [shape = 'u8[131072]{0}', space=vmem, size = 0x20000, scoped, tag = 'input window, operand 0']
    #allocation3 [shape = 's32[2]{0}', space=sflag, size = 0x8, scoped, tag = 'scoped memory for tpu_custom_call.1']
    #allocation4 [shape = 's32[2]{0}', space=sflag, size = 0x8, scoped, tag = 'scoped memory for tpu_custom_call.1']
    #allocation5 [shape = 'u8[32768]{0}', space=vmem, size = 0x8000, scoped, tag = 'input window, operand 1, single buffered']
    #allocation6 [shape = 's32[1]{0}', space=sflag, size = 0x4, scoped, tag = 'scoped memory for tpu_custom_call.1']
    #allocation7 [shape = 'u8[131072]{0}', space=vmem, size = 0x20000, scoped, tag = 'output window, operand 0']
    %12 = vsyncpa [#allocation3], 0
    %s13 = scalar_lea.sflag [#allocation3], 1
    %14 = vsyncpa %s13, 0
    %15 = vsyncpa [#allocation6], 0
    %16 = vsyncpa [#allocation4], 0
    %s17 = scalar_lea.sflag [#allocation4], 1
    %18 = vsyncpa %s17, 0
    loop: start=0, step=1, limit=4
    $region2: #{tpu_custom_call.1} parent=1 // loop_pre_header
      _
    $region3: #{tpu_custom_call.1} parent=1 // loop_header
      %s20 = sphi 0, %s24
      %p21 = scmp.ge.s32.totalorder %s20, 4
      %s30 = sphi 0, %s32
      %s33 = sphi 0, %s30
      %s34 = sphi 0, %s33
      %s50 = sphi 0, %s34
      %s54 = sphi 0, %s54
      %s56 = sphi 0, %s54
      %s57 = sphi 0, %s56
      %s71 = sphi 0, %s57
      %s75 = sphi 0, %s75
      %s77 = sphi 0, %s75
      %s78 = sphi 0, %s77
      %s92 = sphi 0, %s78
      %s96 = sphi 0, %s96
      %s98 = sphi 0, %s96
      %s99 = sphi 0, %s98
      %s113 = sphi 0, %s99
      %s119 = sphi 0, %s121
      %s122 = sphi 0, %s119
      %s123 = sphi 0, %s122
      %s139 = sphi 0, %s123
      %s145 = sphi 0, %s147
      %s148 = sphi 0, %s145
      %s149 = sphi 0, %s148
      %s165 = sphi 0, %s149
      %s171 = sphi 0, %s173
      %s174 = sphi 0, %s171
      %s175 = sphi 0, %s174
      %s191 = sphi 0, %s175
    $region4: #{tpu_custom_call.1} parent=1 // loop_header_branch
      %23 = sbr.rel (%p21) target = $region8
    $region5: #{tpu_custom_call.1} parent=1 // loop_body
      %s25 = ssub.s32 %s20, 1
      %s26 = ssub.s32 %s20, 2
      %s27 = sadd.s32 %s20, 1
      %s28 = ssub.s32 %s20, %s27
      %p29 = scmp.eq.s32.totalorder %s28, 0
      %s31 = sadd.s32 %s30, 1
      %s32 = scalar_select %p29, %s30, %s31
      %p35 = pneg %p29
      %p36 = scmp.eq.s32.totalorder %s20, 1
      %p37 = por %p35, %p36
      %p38 = scmp.ne.s32.totalorder %s30, %s33
      %p39 = scmp.eq.s32.totalorder %s20, 0
      %p40 = por %p38, %p39
      %p41 = scmp.ne.s32.totalorder %s30, %s33
      %p42 = scmp.eq.s32.totalorder %s25, 1
      %p43 = por %p41, %p42
      %p44 = scmp.ne.s32.totalorder %s33, %s34
      %p45 = scmp.eq.s32.totalorder %s25, 0
      %p46 = por %p44, %p45
      %p47 = scmp.ne.s32.totalorder %s33, %s34
      %p48 = scmp.eq.s32.totalorder %s26, 1
      %p49 = por %p47, %p48
      %p51 = scmp.ne.s32.totalorder %s34, %s50
      %p52 = scmp.eq.s32.totalorder %s26, 0
      %p53 = por %p51, %p52
      %s55 = sadd.s32 %s54, 1
      %p58 = scmp.eq.s32.totalorder %s20, 1
      %p59 = scmp.ne.s32.totalorder %s54, %s56
      %p60 = scmp.eq.s32.totalorder %s20, 0
      %p61 = por %p59, %p60
      %p62 = scmp.ne.s32.totalorder %s54, %s56
      %p63 = scmp.eq.s32.totalorder %s25, 1
      %p64 = por %p62, %p63
      %p65 = scmp.ne.s32.totalorder %s56, %s57
      %p66 = scmp.eq.s32.totalorder %s25, 0
      %p67 = por %p65, %p66
      %p68 = scmp.ne.s32.totalorder %s56, %s57
      %p69 = scmp.eq.s32.totalorder %s26, 1
      %p70 = por %p68, %p69
      %p72 = scmp.ne.s32.totalorder %s57, %s71
      %p73 = scmp.eq.s32.totalorder %s26, 0
      %p74 = por %p72, %p73
      %s76 = sadd.s32 %s75, 1
      %p79 = scmp.eq.s32.totalorder %s20, 1
      %p80 = scmp.ne.s32.totalorder %s75, %s77
      %p81 = scmp.eq.s32.totalorder %s20, 0
      %p82 = por %p80, %p81
      %p83 = scmp.ne.s32.totalorder %s75, %s77
      %p84 = scmp.eq.s32.totalorder %s25, 1
      %p85 = por %p83, %p84
      %p86 = scmp.ne.s32.totalorder %s77, %s78
      %p87 = scmp.eq.s32.totalorder %s25, 0
      %p88 = por %p86, %p87
      %p89 = scmp.ne.s32.totalorder %s77, %s78
      %p90 = scmp.eq.s32.totalorder %s26, 1
      %p91 = por %p89, %p90
      %p93 = scmp.ne.s32.totalorder %s78, %s92
      %p94 = scmp.eq.s32.totalorder %s26, 0
      %p95 = por %p93, %p94
      %s97 = sadd.s32 %s96, 1
      %p100 = scmp.eq.s32.totalorder %s20, 1
      %p101 = scmp.ne.s32.totalorder %s96, %s98
      %p102 = scmp.eq.s32.totalorder %s20, 0
      %p103 = por %p101, %p102
      %p104 = scmp.ne.s32.totalorder %s96, %s98
      %p105 = scmp.eq.s32.totalorder %s25, 1
      %p106 = por %p104, %p105
      %p107 = scmp.ne.s32.totalorder %s98, %s99
      %p108 = scmp.eq.s32.totalorder %s25, 0
      %p109 = por %p107, %p108
      %p110 = scmp.ne.s32.totalorder %s98, %s99
      %p111 = scmp.eq.s32.totalorder %s26, 1
      %p112 = por %p110, %p111
      %p114 = scmp.ne.s32.totalorder %s99, %s113
      %p115 = scmp.eq.s32.totalorder %s26, 0
      %p116 = por %p114, %p115
      %s117 = ssub.s32 %s20, %s27
      %p118 = scmp.eq.s32.totalorder %s117, 0
      %s120 = sadd.s32 %s119, 1
      %s121 = scalar_select %p118, %s119, %s120
      %p124 = pneg %p118
      %p125 = scmp.eq.s32.totalorder %s20, 1
      %p126 = por %p124, %p125
      %p127 = scmp.ne.s32.totalorder %s119, %s122
      %p128 = scmp.eq.s32.totalorder %s20, 0
      %p129 = por %p127, %p128
      %p130 = scmp.ne.s32.totalorder %s119, %s122
      %p131 = scmp.eq.s32.totalorder %s25, 1
      %p132 = por %p130, %p131
      %p133 = scmp.ne.s32.totalorder %s122, %s123
      %p134 = scmp.eq.s32.totalorder %s25, 0
      %p135 = por %p133, %p134
      %p136 = scmp.ne.s32.totalorder %s122, %s123
      %p137 = scmp.eq.s32.totalorder %s26, 1
      %p138 = por %p136, %p137
      %p140 = scmp.ne.s32.totalorder %s123, %s139
      %p141 = scmp.eq.s32.totalorder %s26, 0
      %p142 = por %p140, %p141
      %s143 = ssub.s32 %s20, %s27
      %p144 = scmp.eq.s32.totalorder %s143, 0
      %s146 = sadd.s32 %s145, 1
      %s147 = scalar_select %p144, %s145, %s146
      %p150 = pneg %p144
      %p151 = scmp.eq.s32.totalorder %s20, 1
      %p152 = por %p150, %p151
      %p153 = scmp.ne.s32.totalorder %s145, %s148
      %p154 = scmp.eq.s32.totalorder %s20, 0
      %p155 = por %p153, %p154
      %p156 = scmp.ne.s32.totalorder %s145, %s148
      %p157 = scmp.eq.s32.totalorder %s25, 1
      %p158 = por %p156, %p157
      %p159 = scmp.ne.s32.totalorder %s148, %s149
      %p160 = scmp.eq.s32.totalorder %s25, 0
      %p161 = por %p159, %p160
      %p162 = scmp.ne.s32.totalorder %s148, %s149
      %p163 = scmp.eq.s32.totalorder %s26, 1
      %p164 = por %p162, %p163
      %p166 = scmp.ne.s32.totalorder %s149, %s165
      %p167 = scmp.eq.s32.totalorder %s26, 0
      %p168 = por %p166, %p167
      %s169 = ssub.s32 %s20, %s27
      %p170 = scmp.eq.s32.totalorder %s169, 0
      %s172 = sadd.s32 %s171, 1
      %s173 = scalar_select %p170, %s171, %s172
      %p176 = pneg %p170
      %p177 = scmp.eq.s32.totalorder %s20, 1
      %p178 = por %p176, %p177
      %p179 = scmp.ne.s32.totalorder %s171, %s174
      %p180 = scmp.eq.s32.totalorder %s20, 0
      %p181 = por %p179, %p180
      %p182 = scmp.ne.s32.totalorder %s171, %s174
      %p183 = scmp.eq.s32.totalorder %s25, 1
      %p184 = por %p182, %p183
      %p185 = scmp.ne.s32.totalorder %s174, %s175
      %p186 = scmp.eq.s32.totalorder %s25, 0
      %p187 = por %p185, %p186
      %p188 = scmp.ne.s32.totalorder %s174, %s175
      %p189 = scmp.eq.s32.totalorder %s26, 1
      %p190 = por %p188, %p189
      %p192 = scmp.ne.s32.totalorder %s175, %s191
      %p193 = scmp.eq.s32.totalorder %s26, 0
      %p194 = por %p192, %p193
      %p195 = scmp.le.s32.totalorder 1, %s20
      %p196 = scmp.lt.s32.totalorder %s20, 3
      %p197 = pnand %p195, %p196
      %p198 = pneg %p197
      // Predicated region
      $region9: #{tpu_custom_call.1} parent=5 // pred_check
        _
      $region10: #{tpu_custom_call.1} parent=5 // pred_check_branch
        %200 = sbr.rel (%p197) target = $region12
      $region11: #{tpu_custom_call.1} parent=5 // pred_region
        %s201 = ssub.s32 %s20, 1
        // Predicated region
        $region13: #{tpu_custom_call.1} parent=11 // pred_check
          %p202 = pneg %p67
        $region14: #{tpu_custom_call.1} parent=11 // pred_check_branch
          %204 = sbr.rel (%p202) target = $region16
        $region15: #{tpu_custom_call.1} parent=11 // pred_region
          %s206 = ssub.s32 1024, 1024
          %207 = vsyncadd [#allocation6], %s206
          %s208 = sshll.u32 [#allocation5], 4
          %s209 = int_to_ptr.vmem [resolvable:$true] %s208
          %214 = dma.hbm_to_vmem [thread:$0]  %s1, 1024, %s209, [#allocation6], 64, 64, 4
        $region16: #{tpu_custom_call.1} parent=11 // pred_fallthru
          _
        // Predicated region
        $region17: #{tpu_custom_call.1} parent=11 // pred_check
          %p215 = pneg %p88
        $region18: #{tpu_custom_call.1} parent=11 // pred_check_branch
          %217 = sbr.rel (%p215) target = $region20
        $region19: #{tpu_custom_call.1} parent=11 // pred_region
          _
        $region20: #{tpu_custom_call.1} parent=11 // pred_fallthru
          _
        // Predicated region
        $region21: #{tpu_custom_call.1} parent=11 // pred_check
          %p218 = pneg %p109
        $region22: #{tpu_custom_call.1} parent=11 // pred_check_branch
          %220 = sbr.rel (%p218) target = $region24
        $region23: #{tpu_custom_call.1} parent=11 // pred_region
          _
        $region24: #{tpu_custom_call.1} parent=11 // pred_fallthru
          _
      $region12: #{tpu_custom_call.1} parent=5 // pred_fallthru
        _
      %p221 = scmp.lt.s32.totalorder %s20, 2
      // Predicated region
      $region25: #{tpu_custom_call.1} parent=5 // pred_check
        %p222 = pneg %p221
      $region26: #{tpu_custom_call.1} parent=5 // pred_check_branch
        %224 = sbr.rel (%p222) target = $region28
      $region27: #{tpu_custom_call.1} parent=5 // pred_region
        // Predicated region
        $region29: #{tpu_custom_call.1} parent=27 // pred_check
          %p225 = pneg %p40
        $region30: #{tpu_custom_call.1} parent=27 // pred_check_branch
          %227 = sbr.rel (%p225) target = $region32
        $region31: #{tpu_custom_call.1} parent=27 // pred_region
          %s228 = sand.u32 %s30, 1
          %s229 = scalar_lea.sflag [#allocation3], %s228
          %s230 = sand.u32 %s30, 1
          %s231 = smul.addr %s230, 128
          %s232 = scalar_lea.vmem [#allocation2], %s231
          %s233 = smul.u32 32, %s20
          %s235 = ssub.s32 2048, 2048
          %236 = vsyncadd %s229, %s235
          %s237 = smul.addr %s233, 64
          %s238 = scalar_lea.hbm %s0, %s237
          %s239 = sshll.u32 %s232, 4
          %s240 = int_to_ptr.vmem [resolvable:$true] %s239
          %245 = dma.hbm_to_vmem [thread:$0]  %s238, 2048, %s240, %s229, 64, 64, 4
        $region32: #{tpu_custom_call.1} parent=27 // pred_fallthru
          _
      $region28: #{tpu_custom_call.1} parent=5 // pred_fallthru
        _
      %p246 = scmp.le.s32.totalorder 1, %s20
      %p247 = scmp.lt.s32.totalorder %s20, 3
      %p248 = pnand %p246, %p247
      %p249 = pneg %p248
      // Predicated region
      $region33: #{tpu_custom_call.1} parent=5 // pred_check
        _
      $region34: #{tpu_custom_call.1} parent=5 // pred_check_branch
        %251 = sbr.rel (%p248) target = $region36
      $region35: #{tpu_custom_call.1} parent=5 // pred_region
        %s252 = ssub.s32 %s20, 1
        %s253 = sand.u32 %s33, 1
        %s254 = scalar_lea.sflag [#allocation3], %s253
        %s255 = sand.u32 %s33, 1
        %s256 = smul.addr %s255, 128
        %s257 = scalar_lea.vmem [#allocation2], %s256
        // Predicated region
        $region37: #{tpu_custom_call.1} parent=35 // pred_check
          %p258 = pneg %p46
        $region38: #{tpu_custom_call.1} parent=35 // pred_check_branch
          %260 = sbr.rel (%p258) target = $region40
        $region39: #{tpu_custom_call.1} parent=35 // pred_region
          %261 = dma.done %s254, 2048
        $region40: #{tpu_custom_call.1} parent=35 // pred_fallthru
          _
        // Predicated region
        $region41: #{tpu_custom_call.1} parent=35 // pred_check
          %p262 = pneg %p67
        $region42: #{tpu_custom_call.1} parent=35 // pred_check_branch
          %264 = sbr.rel (%p262) target = $region44
        $region43: #{tpu_custom_call.1} parent=35 // pred_region
          %265 = dma.done [#allocation6], 1024
        $region44: #{tpu_custom_call.1} parent=35 // pred_fallthru
          _
        %s266 = sand.u32 %s33, 1
        %s267 = scalar_lea.sflag [#allocation3], %s266
        %s268 = sand.u32 %s33, 1
        %s269 = smul.addr %s268, 128
        %s270 = scalar_lea.vmem [#allocation2], %s269
        %p271 = pneg %p46
        %p272 = pneg %p43
        %p273 = pneg %p67
        %p274 = pneg %p64
        %p275 = pneg %p88
        %p276 = pneg %p85
        %p277 = pneg %p109
        %p278 = pneg %p106
        %p279 = pneg %p135
        %p280 = pneg %p132
        %s281 = sand.u32 %s122, 1
        %s282 = scalar_lea.sflag [#allocation4], %s281
        %s283 = sand.u32 %s122, 1
        %s284 = smul.addr %s283, 128
        %s285 = scalar_lea.vmem [#allocation7], %s284
        %p286 = pneg %p161
        %p287 = pneg %p158
        %s288 = smul.u32 32, %s25
        %p289 = scmp.lt.s32.totalorder %s288, 63
        %s290 = scalar_select %p289, %s288, 63
        %s291 = smul.addr %s290, 8
        %s292 = scalar_lea.vmem %s5, %s291
        %p293 = pneg %p187
        %p294 = pneg %p184
        %s295 = smul.u32 32, %s25
        %p296 = scmp.lt.s32.totalorder %s295, 63
        %s297 = scalar_select %p296, %s295, 63
        %s298 = smul.addr %s297, 8
        %s299 = scalar_lea.vmem %s6, %s298
        %s300 = smul.u32 32, %s25
        %s301 = smul.u32 32, %s25
        %s302 = smul.u32 32, %s25
        %p303 = scmp.lt.s32.totalorder %s302, 63
        %s304 = scalar_select %p303, %s302, 63
        %s305 = smul.addr %s304, 8
        %s306 = scalar_lea.vmem %s5, %s305
        %s307 = smul.u32 32, %s25
        %s308 = smul.u32 32, %s25
        %p309 = scmp.lt.s32.totalorder %s308, 63
        %s310 = scalar_select %p309, %s308, 63
        %s311 = smul.addr %s310, 8
        %s312 = scalar_lea.vmem %s6, %s311
        %s313 = smul.u32 32, %s25
        %v315 = vld [vmem:[%s257] sm:$0xf]
        %v316 = vld [vmem:[%s257 + $0x4] sm:$0xf]
        %v317 = vld [vmem:[%s257 + $0x8] sm:$0xf]
        %v318 = vld [vmem:[%s257 + $0xc] sm:$0xf]
        %v319 = vld [vmem:[%s257 + $0x10] sm:$0xf]
        %v320 = vld [vmem:[%s257 + $0x14] sm:$0xf]
        %v321 = vld [vmem:[%s257 + $0x18] sm:$0xf]
        %v322 = vld [vmem:[%s257 + $0x1c] sm:$0xf]
        %v323 = vld [vmem:[%s257 + $0x20] sm:$0xf]
        %v324 = vld [vmem:[%s257 + $0x24] sm:$0xf]
        %v325 = vld [vmem:[%s257 + $0x28] sm:$0xf]
        %v326 = vld [vmem:[%s257 + $0x2c] sm:$0xf]
        %v327 = vld [vmem:[%s257 + $0x30] sm:$0xf]
        %v328 = vld [vmem:[%s257 + $0x34] sm:$0xf]
        %v329 = vld [vmem:[%s257 + $0x38] sm:$0xf]
        %v330 = vld [vmem:[%s257 + $0x3c] sm:$0xf]
        %v331 = vld [vmem:[%s257 + $0x40] sm:$0xf]
        %v332 = vld [vmem:[%s257 + $0x44] sm:$0xf]
        %v333 = vld [vmem:[%s257 + $0x48] sm:$0xf]
        %v334 = vld [vmem:[%s257 + $0x4c] sm:$0xf]
        %v335 = vld [vmem:[%s257 + $0x50] sm:$0xf]
        %v336 = vld [vmem:[%s257 + $0x54] sm:$0xf]
        %v337 = vld [vmem:[%s257 + $0x58] sm:$0xf]
        %v338 = vld [vmem:[%s257 + $0x5c] sm:$0xf]
        %v339 = vld [vmem:[%s257 + $0x60] sm:$0xf]
        %v340 = vld [vmem:[%s257 + $0x64] sm:$0xf]
        %v341 = vld [vmem:[%s257 + $0x68] sm:$0xf]
        %v342 = vld [vmem:[%s257 + $0x6c] sm:$0xf]
        %v343 = vld [vmem:[%s257 + $0x70] sm:$0xf]
        %v344 = vld [vmem:[%s257 + $0x74] sm:$0xf]
        %v345 = vld [vmem:[%s257 + $0x78] sm:$0xf]
        %v346 = vld [vmem:[%s257 + $0x7c] sm:$0xf]
        %v347 = vld [vmem:[#allocation5] sm:$0xf]
        %v348 = vld [vmem:[#allocation5 + $0x4] sm:$0xf]
        %v349 = vld [vmem:[#allocation5 + $0x8] sm:$0xf]
        %v350 = vld [vmem:[#allocation5 + $0xc] sm:$0xf]
        %v351 = vld [vmem:[#allocation5 + $0x10] sm:$0xf]
        %v352 = vld [vmem:[#allocation5 + $0x14] sm:$0xf]
        %v353 = vld [vmem:[#allocation5 + $0x18] sm:$0xf]
        %v354 = vld [vmem:[#allocation5 + $0x1c] sm:$0xf]
        %v355 = vld [vmem:[#allocation5 + $0x20] sm:$0xf]
        %v356 = vld [vmem:[#allocation5 + $0x24] sm:$0xf]
        %v357 = vld [vmem:[#allocation5 + $0x28] sm:$0xf]
        %v358 = vld [vmem:[#allocation5 + $0x2c] sm:$0xf]
        %v359 = vld [vmem:[#allocation5 + $0x30] sm:$0xf]
        %v360 = vld [vmem:[#allocation5 + $0x34] sm:$0xf]
        %v361 = vld [vmem:[#allocation5 + $0x38] sm:$0xf]
        %v362 = vld [vmem:[#allocation5 + $0x3c] sm:$0xf]
        %v395 = vunpack.c.l.b16 %v315
        %v396 = vunpack.c.l.b16 %v316
        %v397 = vunpack.c.l.b16 %v317
        %v398 = vunpack.c.l.b16 %v318
        %v399 = vunpack.c.l.b16 %v319
        %v400 = vunpack.c.l.b16 %v320
        %v401 = vunpack.c.l.b16 %v321
        %v402 = vunpack.c.l.b16 %v322
        %v403 = vunpack.c.l.b16 %v323
        %v404 = vunpack.c.l.b16 %v324
        %v405 = vunpack.c.l.b16 %v325
        %v406 = vunpack.c.l.b16 %v326
        %v407 = vunpack.c.l.b16 %v327
        %v408 = vunpack.c.l.b16 %v328
        %v409 = vunpack.c.l.b16 %v329
        %v410 = vunpack.c.l.b16 %v330
        %v411 = vunpack.c.l.b16 %v331
        %v412 = vunpack.c.l.b16 %v332
        %v413 = vunpack.c.l.b16 %v333
        %v414 = vunpack.c.l.b16 %v334
        %v415 = vunpack.c.l.b16 %v335
        %v416 = vunpack.c.l.b16 %v336
        %v417 = vunpack.c.l.b16 %v337
        %v418 = vunpack.c.l.b16 %v338
        %v419 = vunpack.c.l.b16 %v339
        %v420 = vunpack.c.l.b16 %v340
        %v421 = vunpack.c.l.b16 %v341
        %v422 = vunpack.c.l.b16 %v342
        %v423 = vunpack.c.l.b16 %v343
        %v424 = vunpack.c.l.b16 %v344
        %v425 = vunpack.c.l.b16 %v345
        %v426 = vunpack.c.l.b16 %v346
        %v427 = vpack.c.b16 %v396, %v395
        %v428 = vpack.c.b16 %v398, %v397
        %v429 = vpack.c.b16 %v400, %v399
        %v430 = vpack.c.b16 %v402, %v401
        %v431 = vpack.c.b16 %v404, %v403
        %v432 = vpack.c.b16 %v406, %v405
        %v433 = vpack.c.b16 %v408, %v407
        %v434 = vpack.c.b16 %v410, %v409
        %v435 = vpack.c.b16 %v412, %v411
        %v436 = vpack.c.b16 %v414, %v413
        %v437 = vpack.c.b16 %v416, %v415
        %v438 = vpack.c.b16 %v418, %v417
        %v439 = vpack.c.b16 %v420, %v419
        %v440 = vpack.c.b16 %v422, %v421
        %v441 = vpack.c.b16 %v424, %v423
        %v442 = vpack.c.b16 %v426, %v425
        %v475 = vunpack.c.l.b16 %v347
        %v476 = vunpack.c.l.b16 %v348
        %v477 = vunpack.c.l.b16 %v349
        %v478 = vunpack.c.l.b16 %v350
        %v479 = vunpack.c.l.b16 %v351
        %v480 = vunpack.c.l.b16 %v352
        %v481 = vunpack.c.l.b16 %v353
        %v482 = vunpack.c.l.b16 %v354
        %v483 = vunpack.c.l.b16 %v355
        %v484 = vunpack.c.l.b16 %v356
        %v485 = vunpack.c.l.b16 %v357
        %v486 = vunpack.c.l.b16 %v358
        %v487 = vunpack.c.l.b16 %v359
        %v488 = vunpack.c.l.b16 %v360
        %v489 = vunpack.c.l.b16 %v361
        %v490 = vunpack.c.l.b16 %v362
        %v491 = vpack.c.b16 %v476, %v475
        %v492 = vpack.c.b16 %v478, %v477
        %v493 = vpack.c.b16 %v480, %v479
        %v494 = vpack.c.b16 %v482, %v481
        %v495 = vpack.c.b16 %v484, %v483
        %v496 = vpack.c.b16 %v486, %v485
        %v497 = vpack.c.b16 %v488, %v487
        %v498 = vpack.c.b16 %v490, %v489
        %507 = vmatprep.subr.bf16.mxu0 0
        %508 = vmatpush1.bf16.msra.mxu0 %v491
        %509 = vmatprep.subr.bf16.mxu0 0
        %510 = vmatpush1.bf16.msra.mxu0 %v492
        %511 = vmatprep.subr.bf16.mxu0 0
        %512 = vmatpush1.bf16.msra.mxu0 %v493
        %513 = vmatprep.subr.bf16.mxu0 0
        %514 = vmatpush1.bf16.msra.mxu0 %v494
        %515 = vmatprep.subr.bf16.mxu0 0
        %516 = vmatpush1.bf16.msra.mxu0 %v495
        %517 = vmatprep.subr.bf16.mxu0 0
        %518 = vmatpush1.bf16.msra.mxu0 %v496
        %519 = vmatprep.subr.bf16.mxu0 0
        %520 = vmatpush1.bf16.msra.mxu0 %v497
        %521 = vmatprep.subr.bf16.mxu0 0
        %522 = vmatpush1.bf16.msra.mxu0 %v498
        %523 = vmatprep.subr.bf16.mxu0 0
        %524 = vmatpush1.bf16.msra.mxu0 0
        %525 = vmatprep.subr.bf16.mxu0 0
        %526 = vmatpush1.bf16.msra.mxu0 0
        %527 = vmatprep.subr.bf16.mxu0 0
        %528 = vmatpush1.bf16.msra.mxu0 0
        %529 = vmatprep.subr.bf16.mxu0 0
        %530 = vmatpush1.bf16.msra.mxu0 0
        %531 = vmatprep.subr.bf16.mxu0 0
        %532 = vmatpush1.bf16.msra.mxu0 0
        %533 = vmatprep.subr.bf16.mxu0 0
        %534 = vmatpush1.bf16.msra.mxu0 0
        %535 = vmatprep.subr.bf16.mxu0 0
        %536 = vmatpush1.bf16.msra.mxu0 0
        %537 = vmatprep.subr.bf16.mxu0 0
        %538 = vmatpush1.bf16.msra.mxu0 0
        %539 = vmatprep.mubr.bf16.mxu0 0
        %540 = vmatmul.mubr.bf16.gmra.mrb[0].mxu0 %v427
        %v541 = vpop.f32.mrb[0].mxu0
        %v542 = vadd.f32 0.0, %v541
        %v543 = vpop.f32.mrb[0].mxu0
        %v544 = vpop.f32.mrb[0].mxu0
        %v545 = vadd.f32 0.0, %v544
        %v546 = vpop.f32.mrb[0].mxu0
        %547 = vmatprep.mubr.bf16.mxu0 0
        %548 = vmatmul.mubr.bf16.gmra.mrb[0].mxu0 %v428
        %v549 = vpop.f32.mrb[0].mxu0
        %v550 = vadd.f32 0.0, %v549
        %v551 = vpop.f32.mrb[0].mxu0
        %v552 = vpop.f32.mrb[0].mxu0
        %v553 = vadd.f32 0.0, %v552
        %v554 = vpop.f32.mrb[0].mxu0
        %555 = vmatprep.mubr.bf16.mxu0 0
        %556 = vmatmul.mubr.bf16.gmra.mrb[0].mxu0 %v429
        %v557 = vpop.f32.mrb[0].mxu0
        %v558 = vadd.f32 0.0, %v557
        %v559 = vpop.f32.mrb[0].mxu0
        %v560 = vpop.f32.mrb[0].mxu0
        %v561 = vadd.f32 0.0, %v560
        %v562 = vpop.f32.mrb[0].mxu0
        %563 = vmatprep.mubr.bf16.mxu0 0
        %564 = vmatmul.mubr.bf16.gmra.mrb[0].mxu0 %v430
        %v565 = vpop.f32.mrb[0].mxu0
        %v566 = vadd.f32 0.0, %v565
        %v567 = vpop.f32.mrb[0].mxu0
        %v568 = vpop.f32.mrb[0].mxu0
        %v569 = vadd.f32 0.0, %v568
        %v570 = vpop.f32.mrb[0].mxu0
        %571 = vmatprep.mubr.bf16.mxu0 0
        %572 = vmatmul.mubr.bf16.gmra.mrb[0].mxu0 %v431
        %v573 = vpop.f32.mrb[0].mxu0
        %v574 = vadd.f32 0.0, %v573
        %v575 = vpop.f32.mrb[0].mxu0
        %v576 = vpop.f32.mrb[0].mxu0
        %v577 = vadd.f32 0.0, %v576
        %v578 = vpop.f32.mrb[0].mxu0
        %579 = vmatprep.mubr.bf16.mxu0 0
        %580 = vmatmul.mubr.bf16.gmra.mrb[0].mxu0 %v432
        %v581 = vpop.f32.mrb[0].mxu0
        %v582 = vadd.f32 0.0, %v581
        %v583 = vpop.f32.mrb[0].mxu0
        %v584 = vpop.f32.mrb[0].mxu0
        %v585 = vadd.f32 0.0, %v584
        %v586 = vpop.f32.mrb[0].mxu0
        %587 = vmatprep.mubr.bf16.mxu0 0
        %588 = vmatmul.mubr.bf16.gmra.mrb[0].mxu0 %v433
        %v589 = vpop.f32.mrb[0].mxu0
        %v590 = vadd.f32 0.0, %v589
        %v591 = vpop.f32.mrb[0].mxu0
        %v592 = vpop.f32.mrb[0].mxu0
        %v593 = vadd.f32 0.0, %v592
        %v594 = vpop.f32.mrb[0].mxu0
        %595 = vmatprep.mubr.bf16.mxu0 0
        %596 = vmatmul.mubr.bf16.gmra.mrb[0].mxu0 %v434
        %v597 = vpop.f32.mrb[0].mxu0
        %v598 = vadd.f32 0.0, %v597
        %v599 = vpop.f32.mrb[0].mxu0
        %v600 = vpop.f32.mrb[0].mxu0
        %v601 = vadd.f32 0.0, %v600
        %v602 = vpop.f32.mrb[0].mxu0
        %603 = vmatprep.mubr.bf16.mxu0 0
        %604 = vmatmul.mubr.bf16.gmra.mrb[0].mxu0 %v435
        %v605 = vpop.f32.mrb[0].mxu0
        %v606 = vadd.f32 0.0, %v605
        %v607 = vpop.f32.mrb[0].mxu0
        %v608 = vpop.f32.mrb[0].mxu0
        %v609 = vadd.f32 0.0, %v608
        %v610 = vpop.f32.mrb[0].mxu0
        %611 = vmatprep.mubr.bf16.mxu0 0
        %612 = vmatmul.mubr.bf16.gmra.mrb[0].mxu0 %v436
        %v613 = vpop.f32.mrb[0].mxu0
        %v614 = vadd.f32 0.0, %v613
        %v615 = vpop.f32.mrb[0].mxu0
        %v616 = vpop.f32.mrb[0].mxu0
        %v617 = vadd.f32 0.0, %v616
        %v618 = vpop.f32.mrb[0].mxu0
        %619 = vmatprep.mubr.bf16.mxu0 0
        %620 = vmatmul.mubr.bf16.gmra.mrb[0].mxu0 %v437
        %v621 = vpop.f32.mrb[0].mxu0
        %v622 = vadd.f32 0.0, %v621
        %v623 = vpop.f32.mrb[0].mxu0
        %v624 = vpop.f32.mrb[0].mxu0
        %v625 = vadd.f32 0.0, %v624
        %v626 = vpop.f32.mrb[0].mxu0
        %627 = vmatprep.mubr.bf16.mxu0 0
        %628 = vmatmul.mubr.bf16.gmra.mrb[0].mxu0 %v438
        %v629 = vpop.f32.mrb[0].mxu0
        %v630 = vadd.f32 0.0, %v629
        %v631 = vpop.f32.mrb[0].mxu0
        %v632 = vpop.f32.mrb[0].mxu0
        %v633 = vadd.f32 0.0, %v632
        %v634 = vpop.f32.mrb[0].mxu0
        %635 = vmatprep.mubr.bf16.mxu0 0
        %636 = vmatmul.mubr.bf16.gmra.mrb[0].mxu0 %v439
        %v637 = vpop.f32.mrb[0].mxu0
        %v638 = vadd.f32 0.0, %v637
        %v639 = vpop.f32.mrb[0].mxu0
        %v640 = vpop.f32.mrb[0].mxu0
        %v641 = vadd.f32 0.0, %v640
        %v642 = vpop.f32.mrb[0].mxu0
        %643 = vmatprep.mubr.bf16.mxu0 0
        %644 = vmatmul.mubr.bf16.gmra.mrb[0].mxu0 %v440
        %v645 = vpop.f32.mrb[0].mxu0
        %v646 = vadd.f32 0.0, %v645
        %v647 = vpop.f32.mrb[0].mxu0
        %v648 = vpop.f32.mrb[0].mxu0
        %v649 = vadd.f32 0.0, %v648
        %v650 = vpop.f32.mrb[0].mxu0
        %651 = vmatprep.mubr.bf16.mxu0 0
        %652 = vmatmul.mubr.bf16.gmra.mrb[0].mxu0 %v441
        %v653 = vpop.f32.mrb[0].mxu0
        %v654 = vadd.f32 0.0, %v653
        %v655 = vpop.f32.mrb[0].mxu0
        %v656 = vpop.f32.mrb[0].mxu0
        %v657 = vadd.f32 0.0, %v656
        %v658 = vpop.f32.mrb[0].mxu0
        %659 = vmatprep.mubr.bf16.mxu0 0
        %660 = vmatmul.mubr.bf16.gmra.mrb[0].mxu0 %v442
        %v661 = vpop.f32.mrb[0].mxu0
        %v662 = vadd.f32 0.0, %v661
        %v663 = vpop.f32.mrb[0].mxu0
        %v664 = vpop.f32.mrb[0].mxu0
        %v665 = vadd.f32 0.0, %v664
        %v666 = vpop.f32.mrb[0].mxu0
        %667 = vdwg.mxu0
        %v668 = vld [vmem:[%s2] sm:$0x1]
        %v670 = vlaneseq
        %v671 = vshrl.u32 %v670, 7
        %v672 = vsub.s32 0, %v671
        %v673 = vrot.slane %v668, %v672
        %v675 = vmul.f32 %v542, %v673
        %v676 = vmul.f32 %v545, %v673
        %v677 = vmul.f32 %v550, %v673
        %v678 = vmul.f32 %v553, %v673
        %v679 = vmul.f32 %v558, %v673
        %v680 = vmul.f32 %v561, %v673
        %v681 = vmul.f32 %v566, %v673
        %v682 = vmul.f32 %v569, %v673
        %v683 = vmul.f32 %v574, %v673
        %v684 = vmul.f32 %v577, %v673
        %v685 = vmul.f32 %v582, %v673
        %v686 = vmul.f32 %v585, %v673
        %v687 = vmul.f32 %v590, %v673
        %v688 = vmul.f32 %v593, %v673
        %v689 = vmul.f32 %v598, %v673
        %v690 = vmul.f32 %v601, %v673
        %v691 = vmul.f32 %v606, %v673
        %v692 = vmul.f32 %v609, %v673
        %v693 = vmul.f32 %v614, %v673
        %v694 = vmul.f32 %v617, %v673
        %v695 = vmul.f32 %v622, %v673
        %v696 = vmul.f32 %v625, %v673
        %v697 = vmul.f32 %v630, %v673
        %v698 = vmul.f32 %v633, %v673
        %v699 = vmul.f32 %v638, %v673
        %v700 = vmul.f32 %v641, %v673
        %v701 = vmul.f32 %v646, %v673
        %v702 = vmul.f32 %v649, %v673
        %v703 = vmul.f32 %v654, %v673
        %v704 = vmul.f32 %v657, %v673
        %v705 = vmul.f32 %v662, %v673
        %v706 = vmul.f32 %v665, %v673
        %707 = vadd.xlane.f32.xlu0 %v675
        %v708 = vpop.xlane.xlu0 %707
        %709 = vadd.xlane.f32.xlu0 %v676
        %v710 = vpop.xlane.xlu0 %709
        %711 = vadd.xlane.f32.xlu0 %v677
        %v712 = vpop.xlane.xlu0 %711
        %713 = vadd.xlane.f32.xlu0 %v678
        %v714 = vpop.xlane.xlu0 %713
        %715 = vadd.xlane.f32.xlu0 %v679
        %v716 = vpop.xlane.xlu0 %715
        %717 = vadd.xlane.f32.xlu0 %v680
        %v718 = vpop.xlane.xlu0 %717
        %719 = vadd.xlane.f32.xlu0 %v681
        %v720 = vpop.xlane.xlu0 %719
        %721 = vadd.xlane.f32.xlu0 %v682
        %v722 = vpop.xlane.xlu0 %721
        %723 = vadd.xlane.f32.xlu0 %v683
        %v724 = vpop.xlane.xlu0 %723
        %725 = vadd.xlane.f32.xlu0 %v684
        %v726 = vpop.xlane.xlu0 %725
        %727 = vadd.xlane.f32.xlu0 %v685
        %v728 = vpop.xlane.xlu0 %727
        %729 = vadd.xlane.f32.xlu0 %v686
        %v730 = vpop.xlane.xlu0 %729
        %731 = vadd.xlane.f32.xlu0 %v687
        %v732 = vpop.xlane.xlu0 %731
        %733 = vadd.xlane.f32.xlu0 %v688
        %v734 = vpop.xlane.xlu0 %733
        %735 = vadd.xlane.f32.xlu0 %v689
        %v736 = vpop.xlane.xlu0 %735
        %737 = vadd.xlane.f32.xlu0 %v690
        %v738 = vpop.xlane.xlu0 %737
        %739 = vadd.xlane.f32.xlu0 %v691
        %v740 = vpop.xlane.xlu0 %739
        %741 = vadd.xlane.f32.xlu0 %v692
        %v742 = vpop.xlane.xlu0 %741
        %743 = vadd.xlane.f32.xlu0 %v693
        %v744 = vpop.xlane.xlu0 %743
        %745 = vadd.xlane.f32.xlu0 %v694
        %v746 = vpop.xlane.xlu0 %745
        %747 = vadd.xlane.f32.xlu0 %v695
        %v748 = vpop.xlane.xlu0 %747
        %749 = vadd.xlane.f32.xlu0 %v696
        %v750 = vpop.xlane.xlu0 %749
        %751 = vadd.xlane.f32.xlu0 %v697
        %v752 = vpop.xlane.xlu0 %751
        %753 = vadd.xlane.f32.xlu0 %v698
        %v754 = vpop.xlane.xlu0 %753
        %755 = vadd.xlane.f32.xlu0 %v699
        %v756 = vpop.xlane.xlu0 %755
        %757 = vadd.xlane.f32.xlu0 %v700
        %v758 = vpop.xlane.xlu0 %757
        %759 = vadd.xlane.f32.xlu0 %v701
        %v760 = vpop.xlane.xlu0 %759
        %761 = vadd.xlane.f32.xlu0 %v702
        %v762 = vpop.xlane.xlu0 %761
        %763 = vadd.xlane.f32.xlu0 %v703
        %v764 = vpop.xlane.xlu0 %763
        %765 = vadd.xlane.f32.xlu0 %v704
        %v766 = vpop.xlane.xlu0 %765
        %767 = vadd.xlane.f32.xlu0 %v705
        %v768 = vpop.xlane.xlu0 %767
        %769 = vadd.xlane.f32.xlu0 %v706
        %v770 = vpop.xlane.xlu0 %769
        %vm771 = vcmask 7168
        %772 = vst.msk [vmem:[%s306] sm:$0xff] %vm771, %v708
        %773 = vst.msk [vmem:[%s306 + $0x8] sm:$0xff] %vm771, %v710
        %774 = vst.msk [vmem:[%s306 + $0x10] sm:$0xff] %vm771, %v712
        %775 = vst.msk [vmem:[%s306 + $0x18] sm:$0xff] %vm771, %v714
        %776 = vst.msk [vmem:[%s306 + $0x20] sm:$0xff] %vm771, %v716
        %777 = vst.msk [vmem:[%s306 + $0x28] sm:$0xff] %vm771, %v718
        %778 = vst.msk [vmem:[%s306 + $0x30] sm:$0xff] %vm771, %v720
        %779 = vst.msk [vmem:[%s306 + $0x38] sm:$0xff] %vm771, %v722
        %780 = vst.msk [vmem:[%s306 + $0x40] sm:$0xff] %vm771, %v724
        %781 = vst.msk [vmem:[%s306 + $0x48] sm:$0xff] %vm771, %v726
        %782 = vst.msk [vmem:[%s306 + $0x50] sm:$0xff] %vm771, %v728
        %783 = vst.msk [vmem:[%s306 + $0x58] sm:$0xff] %vm771, %v730
        %784 = vst.msk [vmem:[%s306 + $0x60] sm:$0xff] %vm771, %v732
        %785 = vst.msk [vmem:[%s306 + $0x68] sm:$0xff] %vm771, %v734
        %786 = vst.msk [vmem:[%s306 + $0x70] sm:$0xff] %vm771, %v736
        %787 = vst.msk [vmem:[%s306 + $0x78] sm:$0xff] %vm771, %v738
        %788 = vst.msk [vmem:[%s306 + $0x80] sm:$0xff] %vm771, %v740
        %789 = vst.msk [vmem:[%s306 + $0x88] sm:$0xff] %vm771, %v742
        %790 = vst.msk [vmem:[%s306 + $0x90] sm:$0xff] %vm771, %v744
        %791 = vst.msk [vmem:[%s306 + $0x98] sm:$0xff] %vm771, %v746
        %792 = vst.msk [vmem:[%s306 + $0xa0] sm:$0xff] %vm771, %v748
        %793 = vst.msk [vmem:[%s306 + $0xa8] sm:$0xff] %vm771, %v750
        %794 = vst.msk [vmem:[%s306 + $0xb0] sm:$0xff] %vm771, %v752
        %795 = vst.msk [vmem:[%s306 + $0xb8] sm:$0xff] %vm771, %v754
        %796 = vst.msk [vmem:[%s306 + $0xc0] sm:$0xff] %vm771, %v756
        %797 = vst.msk [vmem:[%s306 + $0xc8] sm:$0xff] %vm771, %v758
        %798 = vst.msk [vmem:[%s306 + $0xd0] sm:$0xff] %vm771, %v760
        %799 = vst.msk [vmem:[%s306 + $0xd8] sm:$0xff] %vm771, %v762
        %800 = vst.msk [vmem:[%s306 + $0xe0] sm:$0xff] %vm771, %v764
        %801 = vst.msk [vmem:[%s306 + $0xe8] sm:$0xff] %vm771, %v766
        %802 = vst.msk [vmem:[%s306 + $0xf0] sm:$0xff] %vm771, %v768
        %803 = vst.msk [vmem:[%s306 + $0xf8] sm:$0xff] %vm771, %v770
        %v804 = vld [vmem:[%s3] sm:$0x1]
        %v806 = vlaneseq
        %v807 = vshrl.u32 %v806, 7
        %v808 = vsub.s32 0, %v807
        %v809 = vrot.slane %v804, %v808
        %v811 = vmul.f32 %v542, %v809
        %v812 = vmul.f32 %v545, %v809
        %v813 = vmul.f32 %v550, %v809
        %v814 = vmul.f32 %v553, %v809
        %v815 = vmul.f32 %v558, %v809
        %v816 = vmul.f32 %v561, %v809
        %v817 = vmul.f32 %v566, %v809
        %v818 = vmul.f32 %v569, %v809
        %v819 = vmul.f32 %v574, %v809
        %v820 = vmul.f32 %v577, %v809
        %v821 = vmul.f32 %v582, %v809
        %v822 = vmul.f32 %v585, %v809
        %v823 = vmul.f32 %v590, %v809
        %v824 = vmul.f32 %v593, %v809
        %v825 = vmul.f32 %v598, %v809
        %v826 = vmul.f32 %v601, %v809
        %v827 = vmul.f32 %v606, %v809
        %v828 = vmul.f32 %v609, %v809
        %v829 = vmul.f32 %v614, %v809
        %v830 = vmul.f32 %v617, %v809
        %v831 = vmul.f32 %v622, %v809
        %v832 = vmul.f32 %v625, %v809
        %v833 = vmul.f32 %v630, %v809
        %v834 = vmul.f32 %v633, %v809
        %v835 = vmul.f32 %v638, %v809
        %v836 = vmul.f32 %v641, %v809
        %v837 = vmul.f32 %v646, %v809
        %v838 = vmul.f32 %v649, %v809
        %v839 = vmul.f32 %v654, %v809
        %v840 = vmul.f32 %v657, %v809
        %v841 = vmul.f32 %v662, %v809
        %v842 = vmul.f32 %v665, %v809
        %843 = vadd.xlane.f32.xlu0 %v811
        %v844 = vpop.xlane.xlu0 %843
        %845 = vadd.xlane.f32.xlu0 %v812
        %v846 = vpop.xlane.xlu0 %845
        %847 = vadd.xlane.f32.xlu0 %v813
        %v848 = vpop.xlane.xlu0 %847
        %849 = vadd.xlane.f32.xlu0 %v814
        %v850 = vpop.xlane.xlu0 %849
        %851 = vadd.xlane.f32.xlu0 %v815
        %v852 = vpop.xlane.xlu0 %851
        %853 = vadd.xlane.f32.xlu0 %v816
        %v854 = vpop.xlane.xlu0 %853
        %855 = vadd.xlane.f32.xlu0 %v817
        %v856 = vpop.xlane.xlu0 %855
        %857 = vadd.xlane.f32.xlu0 %v818
        %v858 = vpop.xlane.xlu0 %857
        %859 = vadd.xlane.f32.xlu0 %v819
        %v860 = vpop.xlane.xlu0 %859
        %861 = vadd.xlane.f32.xlu0 %v820
        %v862 = vpop.xlane.xlu0 %861
        %863 = vadd.xlane.f32.xlu0 %v821
        %v864 = vpop.xlane.xlu0 %863
        %865 = vadd.xlane.f32.xlu0 %v822
        %v866 = vpop.xlane.xlu0 %865
        %867 = vadd.xlane.f32.xlu0 %v823
        %v868 = vpop.xlane.xlu0 %867
        %869 = vadd.xlane.f32.xlu0 %v824
        %v870 = vpop.xlane.xlu0 %869
        %871 = vadd.xlane.f32.xlu0 %v825
        %v872 = vpop.xlane.xlu0 %871
        %873 = vadd.xlane.f32.xlu0 %v826
        %v874 = vpop.xlane.xlu0 %873
        %875 = vadd.xlane.f32.xlu0 %v827
        %v876 = vpop.xlane.xlu0 %875
        %877 = vadd.xlane.f32.xlu0 %v828
        %v878 = vpop.xlane.xlu0 %877
        %879 = vadd.xlane.f32.xlu0 %v829
        %v880 = vpop.xlane.xlu0 %879
        %881 = vadd.xlane.f32.xlu0 %v830
        %v882 = vpop.xlane.xlu0 %881
        %883 = vadd.xlane.f32.xlu0 %v831
        %v884 = vpop.xlane.xlu0 %883
        %885 = vadd.xlane.f32.xlu0 %v832
        %v886 = vpop.xlane.xlu0 %885
        %887 = vadd.xlane.f32.xlu0 %v833
        %v888 = vpop.xlane.xlu0 %887
        %889 = vadd.xlane.f32.xlu0 %v834
        %v890 = vpop.xlane.xlu0 %889
        %891 = vadd.xlane.f32.xlu0 %v835
        %v892 = vpop.xlane.xlu0 %891
        %893 = vadd.xlane.f32.xlu0 %v836
        %v894 = vpop.xlane.xlu0 %893
        %895 = vadd.xlane.f32.xlu0 %v837
        %v896 = vpop.xlane.xlu0 %895
        %897 = vadd.xlane.f32.xlu0 %v838
        %v898 = vpop.xlane.xlu0 %897
        %899 = vadd.xlane.f32.xlu0 %v839
        %v900 = vpop.xlane.xlu0 %899
        %901 = vadd.xlane.f32.xlu0 %v840
        %v902 = vpop.xlane.xlu0 %901
        %903 = vadd.xlane.f32.xlu0 %v841
        %v904 = vpop.xlane.xlu0 %903
        %905 = vadd.xlane.f32.xlu0 %v842
        %v906 = vpop.xlane.xlu0 %905
        %907 = vst.msk [vmem:[%s312] sm:$0xff] %vm771, %v844
        %908 = vst.msk [vmem:[%s312 + $0x8] sm:$0xff] %vm771, %v846
        %909 = vst.msk [vmem:[%s312 + $0x10] sm:$0xff] %vm771, %v848
        %910 = vst.msk [vmem:[%s312 + $0x18] sm:$0xff] %vm771, %v850
        %911 = vst.msk [vmem:[%s312 + $0x20] sm:$0xff] %vm771, %v852
        %912 = vst.msk [vmem:[%s312 + $0x28] sm:$0xff] %vm771, %v854
        %913 = vst.msk [vmem:[%s312 + $0x30] sm:$0xff] %vm771, %v856
        %914 = vst.msk [vmem:[%s312 + $0x38] sm:$0xff] %vm771, %v858
        %915 = vst.msk [vmem:[%s312 + $0x40] sm:$0xff] %vm771, %v860
        %916 = vst.msk [vmem:[%s312 + $0x48] sm:$0xff] %vm771, %v862
        %917 = vst.msk [vmem:[%s312 + $0x50] sm:$0xff] %vm771, %v864
        %918 = vst.msk [vmem:[%s312 + $0x58] sm:$0xff] %vm771, %v866
        %919 = vst.msk [vmem:[%s312 + $0x60] sm:$0xff] %vm771, %v868
        %920 = vst.msk [vmem:[%s312 + $0x68] sm:$0xff] %vm771, %v870
        %921 = vst.msk [vmem:[%s312 + $0x70] sm:$0xff] %vm771, %v872
        %922 = vst.msk [vmem:[%s312 + $0x78] sm:$0xff] %vm771, %v874
        %923 = vst.msk [vmem:[%s312 + $0x80] sm:$0xff] %vm771, %v876
        %924 = vst.msk [vmem:[%s312 + $0x88] sm:$0xff] %vm771, %v878
        %925 = vst.msk [vmem:[%s312 + $0x90] sm:$0xff] %vm771, %v880
        %926 = vst.msk [vmem:[%s312 + $0x98] sm:$0xff] %vm771, %v882
        %927 = vst.msk [vmem:[%s312 + $0xa0] sm:$0xff] %vm771, %v884
        %928 = vst.msk [vmem:[%s312 + $0xa8] sm:$0xff] %vm771, %v886
        %929 = vst.msk [vmem:[%s312 + $0xb0] sm:$0xff] %vm771, %v888
        %930 = vst.msk [vmem:[%s312 + $0xb8] sm:$0xff] %vm771, %v890
        %931 = vst.msk [vmem:[%s312 + $0xc0] sm:$0xff] %vm771, %v892
        %932 = vst.msk [vmem:[%s312 + $0xc8] sm:$0xff] %vm771, %v894
        %933 = vst.msk [vmem:[%s312 + $0xd0] sm:$0xff] %vm771, %v896
        %934 = vst.msk [vmem:[%s312 + $0xd8] sm:$0xff] %vm771, %v898
        %935 = vst.msk [vmem:[%s312 + $0xe0] sm:$0xff] %vm771, %v900
        %936 = vst.msk [vmem:[%s312 + $0xe8] sm:$0xff] %vm771, %v902
        %937 = vst.msk [vmem:[%s312 + $0xf0] sm:$0xff] %vm771, %v904
        %938 = vst.msk [vmem:[%s312 + $0xf8] sm:$0xff] %vm771, %v906
        %v939 = vpack.c.bf16 %v545, %v542
        %v940 = vpack.c.bf16 %v553, %v550
        %v941 = vpack.c.bf16 %v561, %v558
        %v942 = vpack.c.bf16 %v569, %v566
        %v943 = vpack.c.bf16 %v577, %v574
        %v944 = vpack.c.bf16 %v585, %v582
        %v945 = vpack.c.bf16 %v593, %v590
        %v946 = vpack.c.bf16 %v601, %v598
        %v947 = vpack.c.bf16 %v609, %v606
        %v948 = vpack.c.bf16 %v617, %v614
        %v949 = vpack.c.bf16 %v625, %v622
        %v950 = vpack.c.bf16 %v633, %v630
        %v951 = vpack.c.bf16 %v641, %v638
        %v952 = vpack.c.bf16 %v649, %v646
        %v953 = vpack.c.bf16 %v657, %v654
        %v954 = vpack.c.bf16 %v665, %v662
        %v971 = vunpack.c.l.b16 %v939
        %v972 = vunpack.c.h.b16 %v939
        %v973 = vunpack.c.l.b16 %v940
        %v974 = vunpack.c.h.b16 %v940
        %v975 = vunpack.c.l.b16 %v941
        %v976 = vunpack.c.h.b16 %v941
        %v977 = vunpack.c.l.b16 %v942
        %v978 = vunpack.c.h.b16 %v942
        %v979 = vunpack.c.l.b16 %v943
        %v980 = vunpack.c.h.b16 %v943
        %v981 = vunpack.c.l.b16 %v944
        %v982 = vunpack.c.h.b16 %v944
        %v983 = vunpack.c.l.b16 %v945
        %v984 = vunpack.c.h.b16 %v945
        %v985 = vunpack.c.l.b16 %v946
        %v986 = vunpack.c.h.b16 %v946
        %v987 = vunpack.c.l.b16 %v947
        %v988 = vunpack.c.h.b16 %v947
        %v989 = vunpack.c.l.b16 %v948
        %v990 = vunpack.c.h.b16 %v948
        %v991 = vunpack.c.l.b16 %v949
        %v992 = vunpack.c.h.b16 %v949
        %v993 = vunpack.c.l.b16 %v950
        %v994 = vunpack.c.h.b16 %v950
        %v995 = vunpack.c.l.b16 %v951
        %v996 = vunpack.c.h.b16 %v951
        %v997 = vunpack.c.l.b16 %v952
        %v998 = vunpack.c.h.b16 %v952
        %v999 = vunpack.c.l.b16 %v953
        %v1000 = vunpack.c.h.b16 %v953
        %v1001 = vunpack.c.l.b16 %v954
        %v1002 = vunpack.c.h.b16 %v954
        %v1003 = vpack.c.b16 %v971, %v971
        %v1004 = vpack.c.b16 %v972, %v972
        %v1005 = vpack.c.b16 %v973, %v973
        %v1006 = vpack.c.b16 %v974, %v974
        %v1007 = vpack.c.b16 %v975, %v975
        %v1008 = vpack.c.b16 %v976, %v976
        %v1009 = vpack.c.b16 %v977, %v977
        %v1010 = vpack.c.b16 %v978, %v978
        %v1011 = vpack.c.b16 %v979, %v979
        %v1012 = vpack.c.b16 %v980, %v980
        %v1013 = vpack.c.b16 %v981, %v981
        %v1014 = vpack.c.b16 %v982, %v982
        %v1015 = vpack.c.b16 %v983, %v983
        %v1016 = vpack.c.b16 %v984, %v984
        %v1017 = vpack.c.b16 %v985, %v985
        %v1018 = vpack.c.b16 %v986, %v986
        %v1019 = vpack.c.b16 %v987, %v987
        %v1020 = vpack.c.b16 %v988, %v988
        %v1021 = vpack.c.b16 %v989, %v989
        %v1022 = vpack.c.b16 %v990, %v990
        %v1023 = vpack.c.b16 %v991, %v991
        %v1024 = vpack.c.b16 %v992, %v992
        %v1025 = vpack.c.b16 %v993, %v993
        %v1026 = vpack.c.b16 %v994, %v994
        %v1027 = vpack.c.b16 %v995, %v995
        %v1028 = vpack.c.b16 %v996, %v996
        %v1029 = vpack.c.b16 %v997, %v997
        %v1030 = vpack.c.b16 %v998, %v998
        %v1031 = vpack.c.b16 %v999, %v999
        %v1032 = vpack.c.b16 %v1000, %v1000
        %v1033 = vpack.c.b16 %v1001, %v1001
        %v1034 = vpack.c.b16 %v1002, %v1002
        %1067 = vst [vmem:[%s285] sm:$0xf] %v1003
        %1068 = vst [vmem:[%s285 + $0x4] sm:$0xf] %v1004
        %1069 = vst [vmem:[%s285 + $0x8] sm:$0xf] %v1005
        %1070 = vst [vmem:[%s285 + $0xc] sm:$0xf] %v1006
        %1071 = vst [vmem:[%s285 + $0x10] sm:$0xf] %v1007
        %1072 = vst [vmem:[%s285 + $0x14] sm:$0xf] %v1008
        %1073 = vst [vmem:[%s285 + $0x18] sm:$0xf] %v1009
        %1074 = vst [vmem:[%s285 + $0x1c] sm:$0xf] %v1010
        %1075 = vst [vmem:[%s285 + $0x20] sm:$0xf] %v1011
        %1076 = vst [vmem:[%s285 + $0x24] sm:$0xf] %v1012
        %1077 = vst [vmem:[%s285 + $0x28] sm:$0xf] %v1013
        %1078 = vst [vmem:[%s285 + $0x2c] sm:$0xf] %v1014
        %1079 = vst [vmem:[%s285 + $0x30] sm:$0xf] %v1015
        %1080 = vst [vmem:[%s285 + $0x34] sm:$0xf] %v1016
        %1081 = vst [vmem:[%s285 + $0x38] sm:$0xf] %v1017
        %1082 = vst [vmem:[%s285 + $0x3c] sm:$0xf] %v1018
        %1083 = vst [vmem:[%s285 + $0x40] sm:$0xf] %v1019
        %1084 = vst [vmem:[%s285 + $0x44] sm:$0xf] %v1020
        %1085 = vst [vmem:[%s285 + $0x48] sm:$0xf] %v1021
        %1086 = vst [vmem:[%s285 + $0x4c] sm:$0xf] %v1022
        %1087 = vst [vmem:[%s285 + $0x50] sm:$0xf] %v1023
        %1088 = vst [vmem:[%s285 + $0x54] sm:$0xf] %v1024
        %1089 = vst [vmem:[%s285 + $0x58] sm:$0xf] %v1025
        %1090 = vst [vmem:[%s285 + $0x5c] sm:$0xf] %v1026
        %1091 = vst [vmem:[%s285 + $0x60] sm:$0xf] %v1027
        %1092 = vst [vmem:[%s285 + $0x64] sm:$0xf] %v1028
        %1093 = vst [vmem:[%s285 + $0x68] sm:$0xf] %v1029
        %1094 = vst [vmem:[%s285 + $0x6c] sm:$0xf] %v1030
        %1095 = vst [vmem:[%s285 + $0x70] sm:$0xf] %v1031
        %1096 = vst [vmem:[%s285 + $0x74] sm:$0xf] %v1032
        %1097 = vst [vmem:[%s285 + $0x78] sm:$0xf] %v1033
        %1098 = vst [vmem:[%s285 + $0x7c] sm:$0xf] %v1034
        %s1099 = sand.u32 %s122, 1
        %s1100 = scalar_lea.sflag [#allocation4], %s1099
        %s1101 = sand.u32 %s122, 1
        %s1102 = smul.addr %s1101, 128
        %s1103 = scalar_lea.vmem [#allocation7], %s1102
        %s1104 = smul.u32 32, %s25
        %p1105 = scmp.lt.s32.totalorder %s1104, 63
        %s1106 = scalar_select %p1105, %s1104, 63
        %s1107 = smul.addr %s1106, 8
        %s1108 = scalar_lea.vmem %s5, %s1107
        %s1109 = smul.u32 32, %s25
        %p1110 = scmp.lt.s32.totalorder %s1109, 63
        %s1111 = scalar_select %p1110, %s1109, 63
        %s1112 = smul.addr %s1111, 8
        %s1113 = scalar_lea.vmem %s6, %s1112
        // Predicated region
        $region45: #{tpu_custom_call.1} parent=35 // pred_check
          %p1114 = pneg %p132
        $region46: #{tpu_custom_call.1} parent=35 // pred_check_branch
          %1116 = sbr.rel (%p1114) target = $region48
        $region47: #{tpu_custom_call.1} parent=35 // pred_region
          %s1117 = smul.u32 32, %s25
          %s1119 = ssub.s32 2048, 2048
          %1120 = vsyncadd %s1100, %s1119
          %s1121 = smul.addr %s1117, 64
          %s1122 = scalar_lea.hbm %s4, %s1121
          %s1123 = sshll.u32 %s1103, 4
          %s1124 = int_to_ptr.vmem [resolvable:$true] %s1123
          %1129 = dma.vmem_to_hbm [thread:$0]  %s1124, 2048, %s1122, %s1100, 64, 64, 4
        $region48: #{tpu_custom_call.1} parent=35 // pred_fallthru
          _
        // Predicated region
        $region49: #{tpu_custom_call.1} parent=35 // pred_check
          %p1130 = pneg %p158
        $region50: #{tpu_custom_call.1} parent=35 // pred_check_branch
          %1132 = sbr.rel (%p1130) target = $region52
        $region51: #{tpu_custom_call.1} parent=35 // pred_region
          %s1133 = smul.u32 32, %s25
        $region52: #{tpu_custom_call.1} parent=35 // pred_fallthru
          _
        // Predicated region
        $region53: #{tpu_custom_call.1} parent=35 // pred_check
          %p1134 = pneg %p184
        $region54: #{tpu_custom_call.1} parent=35 // pred_check_branch
          %1136 = sbr.rel (%p1134) target = $region56
        $region55: #{tpu_custom_call.1} parent=35 // pred_region
          %s1137 = smul.u32 32, %s25
        $region56: #{tpu_custom_call.1} parent=35 // pred_fallthru
          _
      $region36: #{tpu_custom_call.1} parent=5 // pred_fallthru
        _
      %p1138 = scmp.le.s32.totalorder 2, %s20
      // Predicated region
      $region57: #{tpu_custom_call.1} parent=5 // pred_check
        %p1139 = pneg %p1138
      $region58: #{tpu_custom_call.1} parent=5 // pred_check_branch
        %1141 = sbr.rel (%p1139) target = $region60
      $region59: #{tpu_custom_call.1} parent=5 // pred_region
        %s1142 = ssub.s32 %s20, 2
        // Predicated region
        $region61: #{tpu_custom_call.1} parent=59 // pred_check
          %p1143 = pneg %p138
        $region62: #{tpu_custom_call.1} parent=59 // pred_check_branch
          %1145 = sbr.rel (%p1143) target = $region64
        $region63: #{tpu_custom_call.1} parent=59 // pred_region
          %s1146 = sand.u32 %s123, 1
          %s1147 = scalar_lea.sflag [#allocation4], %s1146
          %s1148 = sand.u32 %s123, 1
          %s1149 = smul.addr %s1148, 128
          %s1150 = scalar_lea.vmem [#allocation7], %s1149
          %1151 = dma.done %s1147, 2048
        $region64: #{tpu_custom_call.1} parent=59 // pred_fallthru
          _
        // Predicated region
        $region65: #{tpu_custom_call.1} parent=59 // pred_check
          %p1152 = pneg %p164
        $region66: #{tpu_custom_call.1} parent=59 // pred_check_branch
          %1154 = sbr.rel (%p1152) target = $region68
        $region67: #{tpu_custom_call.1} parent=59 // pred_region
          %s1155 = smul.u32 32, %s26
          %p1156 = scmp.lt.s32.totalorder %s1155, 63
          %s1157 = scalar_select %p1156, %s1155, 63
          %s1158 = smul.addr %s1157, 8
          %s1159 = scalar_lea.vmem %s5, %s1158
        $region68: #{tpu_custom_call.1} parent=59 // pred_fallthru
          _
        // Predicated region
        $region69: #{tpu_custom_call.1} parent=59 // pred_check
          %p1160 = pneg %p190
        $region70: #{tpu_custom_call.1} parent=59 // pred_check_branch
          %1162 = sbr.rel (%p1160) target = $region72
        $region71: #{tpu_custom_call.1} parent=59 // pred_region
          %s1163 = smul.u32 32, %s26
          %p1164 = scmp.lt.s32.totalorder %s1163, 63
          %s1165 = scalar_select %p1164, %s1163, 63
          %s1166 = smul.addr %s1165, 8
          %s1167 = scalar_lea.vmem %s6, %s1166
        $region72: #{tpu_custom_call.1} parent=59 // pred_fallthru
          _
      $region60: #{tpu_custom_call.1} parent=5 // pred_fallthru
        _
    $region6: #{tpu_custom_call.1} parent=1 // loop_footer
      %s24 = sadd.s32 1, %s20
    $region7: #{tpu_custom_call.1} parent=1 // loop_footer_branch
      %19 = sbr.rel target = $region3
    $region8: #{tpu_custom_call.1} parent=1 // loop_exit
      _
    %1168 = vsyncpa [#allocation3], 1
    %s1169 = scalar_lea.sflag [#allocation3], 1
    %1170 = vsyncpa %s1169, 1
    %1171 = vsyncpa [#allocation6], 1
    %1172 = vsyncpa [#allocation4], 1
    %s1173 = scalar_lea.sflag [#allocation4], 1
    %1174 = vsyncpa %s1173, 1

</llo_original>
